<compile_context>
chip_gen: v7x
topology: tpu7x:2x2x1
jax: 0.10.0
libtpu: 0.0.40
codegen_flags: <defaults>
</compile_context>

<pallas_src>
import numpy as np
import jax
import jax.numpy as jnp
from jax.experimental import pallas as pl
from jax.experimental.pallas import tpu as pltpu


_ALIGN = 8  # sublane tile: left zero-pad rows so the in-register concat is aligned


# ----------------------------------------------------------------------------
# In-register im2col slab for a dilated causal conv (no HBM pad, no scratch)
# ----------------------------------------------------------------------------
def _causal_slab(h_f32, k, d):
    """(T, C) f32 -> (T, k*C) bf16 slab.

    Tap j of Conv1d(padding=(k-1)*d) + Chomp1d reads h[t - (k-1-j)*d]
    (zero when negative).  Left-pad with a sublane-tile-aligned zero block,
    take k static slices, and concatenate along channels so all k taps
    contract in a single MXU matmul.  Everything stays in vregs.
    """
    T, C = h_f32.shape
    pad = (k - 1) * d
    if pad == 0:
        return h_f32.astype(jnp.bfloat16)
    zrows = -(-pad // _ALIGN) * _ALIGN                       # pad rounded up to 8
    hp = jnp.concatenate(
        [jnp.zeros((zrows, C), h_f32.dtype), h_f32], axis=0)  # (T + zrows, C)
    parts = [hp[zrows - (k - 1 - j) * d: zrows - (k - 1 - j) * d + T, :]
             for j in range(k)]
    slab = parts[0] if k == 1 else jnp.concatenate(parts, axis=-1)
    return slab.astype(jnp.bfloat16)


# ----------------------------------------------------------------------------
# Fused TCN kernel: all TemporalBlocks + Linear head, one grid step per batch
# ----------------------------------------------------------------------------
def make_tcn_kernel(layer_cfgs):
    """layer_cfgs: tuple of (k, d, has_downsample) per TemporalBlock."""

    def kernel(*refs):
        x_ref, o_ref = refs[0], refs[-1]
        wrefs = refs[1:-1]
        i = 0

        h = x_ref[0].astype(jnp.float32)                      # (T, C0), f32

        for (k, d, has_ds) in layer_cfgs:
            w1, b1, w2, b2 = wrefs[i], wrefs[i + 1], wrefs[i + 2], wrefs[i + 3]
            i += 4
            if has_ds:
                wd, bd = wrefs[i], wrefs[i + 1]
                i += 2

            # conv1 (k dilated causal taps folded into one matmul) + bias + ReLU
            h1 = jnp.dot(_causal_slab(h, k, d), w1[...],
                         preferred_element_type=jnp.float32) + b1[...]
            h1 = jnp.maximum(h1, 0.0)
            # (Dropout2d: eval-mode identity)

            # conv2 + bias + ReLU
            h2 = jnp.dot(_causal_slab(h1, k, d), w2[...],
                         preferred_element_type=jnp.float32) + b2[...]
            h2 = jnp.maximum(h2, 0.0)

            # residual path (1x1 conv iff Cin != Cout), final ReLU
            if has_ds:
                res = jnp.dot(h.astype(jnp.bfloat16), wd[...],
                              preferred_element_type=jnp.float32) + bd[...]
            else:
                res = h
            h = jnp.maximum(h2 + res, 0.0)

        # fused Linear head (keeps the only small-lane store to a single slab)
        lw, lb = wrefs[i], wrefs[i + 1]
        out = jnp.dot(h.astype(jnp.bfloat16), lw[...],
                      preferred_element_type=jnp.float32) + lb[...]
        o_ref[0] = out.astype(o_ref.dtype)

    return kernel


def tcn_forward(x, params):
    """x: (B, T, input_size) f32 -> (B, T, output_size) f32  (== TCN.forward)."""
    B, T, C0 = x.shape
    O = params["lin_w"].shape[1]

    layer_cfgs = []
    args = [x]
    in_specs = [pl.BlockSpec((1, T, C0), lambda b: (b, 0, 0))]

    def _full(arr):
        return pl.BlockSpec(arr.shape, lambda b, _n=arr.ndim: (0,) * _n)

    flops = 0
    in_c = C0
    for blk in params["blocks"]:
        k, d = blk["k"], blk["d"]
        out_c = blk["w1"].shape[1]
        has_ds = blk["wd"] is not None
        layer_cfgs.append((k, d, has_ds))
        for name in ("w1", "b1", "w2", "b2"):
            args.append(blk[name])
            in_specs.append(_full(blk[name]))
        if has_ds:
            args.append(blk["wd"]); in_specs.append(_full(blk["wd"]))
            args.append(blk["bd"]); in_specs.append(_full(blk["bd"]))
        flops += 2 * B * T * (k * in_c) * out_c          # conv1
        flops += 2 * B * T * (k * out_c) * out_c         # conv2
        if has_ds:
            flops += 2 * B * T * in_c * out_c            # 1x1 downsample
        in_c = out_c
    args.append(params["lin_w"]); in_specs.append(_full(params["lin_w"]))
    args.append(params["lin_b"]); in_specs.append(_full(params["lin_b"]))
    flops += 2 * B * T * in_c * O

    bytes_accessed = B * T * O * 4 + sum(
        int(a.size) * a.dtype.itemsize for a in args)

    kernel = make_tcn_kernel(tuple(layer_cfgs))
    return pl.pallas_call(
        kernel,
        out_shape=jax.ShapeDtypeStruct((B, T, O), jnp.float32),
        grid_spec=pltpu.PrefetchScalarGridSpec(
            num_scalar_prefetch=0,
            grid=(B,),
            in_specs=in_specs,
            out_specs=pl.BlockSpec((1, T, O), lambda b: (b, 0, 0)),
        ),
        compiler_params=pltpu.CompilerParams(
            dimension_semantics=("parallel",)),
        cost_estimate=pl.CostEstimate(
            flops=flops, transcendentals=0, bytes_accessed=bytes_accessed),
    )(*args)


# ----------------------------------------------------------------------------
# Parameter init (deterministic, shapes implied by the nn.Module)
# Conv weights stored as (k*Cin, Cout) bf16: torch (Cout,Cin,k) -> permute to
# (k,Cin,Cout) -> reshape; rows [j*Cin:(j+1)*Cin] are tap j.
# ----------------------------------------------------------------------------
def init_tcn_params(key, input_size, output_size, num_channels, kernel_size):
    params = {"blocks": []}
    in_c = input_size
    for i, out_c in enumerate(num_channels):
        d = 2 ** i
        key, k1, k2, k3, k4, k5, k6 = jax.random.split(key, 7)
        blk = {
            "k": kernel_size,
            "d": d,
            "w1": (0.01 * jax.random.normal(
                k1, (kernel_size * in_c, out_c), jnp.float32)).astype(jnp.bfloat16),
            "b1": 0.1 * jax.random.normal(k2, (1, out_c), jnp.float32),
            "w2": (0.01 * jax.random.normal(
                k3, (kernel_size * out_c, out_c), jnp.float32)).astype(jnp.bfloat16),
            "b2": 0.1 * jax.random.normal(k4, (1, out_c), jnp.float32),
        }
        if in_c != out_c:
            blk["wd"] = (0.01 * jax.random.normal(
                k5, (in_c, out_c), jnp.float32)).astype(jnp.bfloat16)
            blk["bd"] = 0.1 * jax.random.normal(k6, (1, out_c), jnp.float32)
        else:
            blk["wd"] = None
            blk["bd"] = None
        params["blocks"].append(blk)
        in_c = out_c
    key, kw, kb = jax.random.split(key, 3)
    params["lin_w"] = (0.1 * jax.random.normal(
        kw, (num_channels[-1], output_size), jnp.float32)).astype(jnp.bfloat16)
    params["lin_b"] = 0.1 * jax.random.normal(kb, (1, output_size), jnp.float32)
    return params


# ----------------------------------------------------------------------------
# Pure-JAX reference with identical numerics (bf16 matmul inputs, f32 accum)
# ----------------------------------------------------------------------------
def _ref_causal_slab(h, k, d):
    B, T, C = h.shape
    pad = (k - 1) * d
    hp = jnp.pad(h, ((0, 0), (pad, 0), (0, 0)))
    parts = [hp[:, j * d: j * d + T, :] for j in range(k)]
    slab = parts[0] if k == 1 else jnp.concatenate(parts, axis=-1)
    return slab.astype(jnp.bfloat16)


def _ref_matmul(a_bf16, w_bf16):
    B, T, K = a_bf16.shape
    out = jnp.dot(a_bf16.reshape(B * T, K), w_bf16,
                  preferred_element_type=jnp.float32)
    return out.reshape(B, T, -1)


def tcn_ref(x, params):
    h = x.astype(jnp.float32)
    for blk in params["blocks"]:
        k, d = blk["k"], blk["d"]
        h1 = jnp.maximum(
            _ref_matmul(_ref_causal_slab(h, k, d), blk["w1"]) + blk["b1"], 0.0)
        h2 = jnp.maximum(
            _ref_matmul(_ref_causal_slab(h1, k, d), blk["w2"]) + blk["b2"], 0.0)
        if blk["wd"] is None:
            res = h
        else:
            res = _ref_matmul(h.astype(jnp.bfloat16), blk["wd"]) + blk["bd"]
        h = jnp.maximum(h2 + res, 0.0)
    return _ref_matmul(h.astype(jnp.bfloat16), params["lin_w"]) + params["lin_b"]


if __name__ == "__main__":
    B, T = 2, 16
    input_size, output_size = 8, 4
    num_channels = [16, 16]
    kernel_size = 2
    # dropout = 0.2  -> eval-mode identity

    key = jax.random.PRNGKey(0)
    key, kx = jax.random.split(key)
    x = jax.random.normal(kx, (B, T, input_size), jnp.float32)
    params = init_tcn_params(key, input_size, output_size, num_channels,
                             kernel_size)

    out = jax.block_until_ready(tcn_forward(x, params))
    ref = np.asarray(tcn_ref(x, params))

    assert out.shape == (B, T, output_size)
    assert np.allclose(np.asarray(out), ref, rtol=5e-3, atol=5e-3), "mismatch"

    print("KERNEL_OK")
</pallas_src>

<mosaic_0001>
module attributes {stable_mosaic.version = 11 : i64} {
  func.func @kernel(%arg0: i32, %arg1: memref<1x16x8xf32, #tpu.memory_space<vmem>>, %arg2: memref<16x16xbf16, #tpu.memory_space<vmem>>, %arg3: memref<1x16xf32, #tpu.memory_space<vmem>>, %arg4: memref<32x16xbf16, #tpu.memory_space<vmem>>, %arg5: memref<1x16xf32, #tpu.memory_space<vmem>>, %arg6: memref<8x16xbf16, #tpu.memory_space<vmem>>, %arg7: memref<1x16xf32, #tpu.memory_space<vmem>>, %arg8: memref<32x16xbf16, #tpu.memory_space<vmem>>, %arg9: memref<1x16xf32, #tpu.memory_space<vmem>>, %arg10: memref<32x16xbf16, #tpu.memory_space<vmem>>, %arg11: memref<1x16xf32, #tpu.memory_space<vmem>>, %arg12: memref<16x4xbf16, #tpu.memory_space<vmem>>, %arg13: memref<1x4xf32, #tpu.memory_space<vmem>>, %arg14: memref<1x16x4xf32, #tpu.memory_space<vmem>>) attributes {dimension_semantics = [#tpu.dimension_semantics<parallel>], iteration_bounds = array<i64: 2>, scalar_prefetch = 0 : i64, scratch_operands = 0 : i64, tpu.core_type = #tpu.core_type<tc>, window_params = [{transform_indices = @transform_0, window_bounds = array<i64: 1, 16, 8>}, {pipeline_mode = #tpu.pipeline_mode<synchronous>, transform_indices = @transform_1, window_bounds = array<i64: 16, 16>}, {pipeline_mode = #tpu.pipeline_mode<synchronous>, transform_indices = @transform_2, window_bounds = array<i64: 1, 16>}, {pipeline_mode = #tpu.pipeline_mode<synchronous>, transform_indices = @transform_3, window_bounds = array<i64: 32, 16>}, {pipeline_mode = #tpu.pipeline_mode<synchronous>, transform_indices = @transform_4, window_bounds = array<i64: 1, 16>}, {pipeline_mode = #tpu.pipeline_mode<synchronous>, transform_indices = @transform_5, window_bounds = array<i64: 8, 16>}, {pipeline_mode = #tpu.pipeline_mode<synchronous>, transform_indices = @transform_6, window_bounds = array<i64: 1, 16>}, {pipeline_mode = #tpu.pipeline_mode<synchronous>, transform_indices = @transform_7, window_bounds = array<i64: 32, 16>}, {pipeline_mode = #tpu.pipeline_mode<synchronous>, transform_indices = @transform_8, window_bounds = array<i64: 1, 16>}, {pipeline_mode = #tpu.pipeline_mode<synchronous>, transform_indices = @transform_9, window_bounds = array<i64: 32, 16>}, {pipeline_mode = #tpu.pipeline_mode<synchronous>, transform_indices = @transform_10, window_bounds = array<i64: 1, 16>}, {pipeline_mode = #tpu.pipeline_mode<synchronous>, transform_indices = @transform_11, window_bounds = array<i64: 16, 4>}, {pipeline_mode = #tpu.pipeline_mode<synchronous>, transform_indices = @transform_12, window_bounds = array<i64: 1, 4>}, {transform_indices = @transform_13, window_bounds = array<i64: 1, 16, 4>}]} {
    %c0 = arith.constant 0 : index
    %c0_0 = arith.constant 0 : index
    %c0_1 = arith.constant 0 : index
    %0 = vector.load %arg1[%c0, %c0_0, %c0_1] : memref<1x16x8xf32, #tpu.memory_space<vmem>>, vector<1x16x8xf32>
    %1 = vector.shape_cast %0 : vector<1x16x8xf32> to vector<16x8xf32>
    %cst = arith.constant 0.000000e+00 : f32
    %2 = vector.broadcast %cst : f32 to vector<8x8xf32>
    %3 = tpu.concatenate %2, %1 in 0 : vector<8x8xf32>, vector<16x8xf32> -> vector<24x8xf32>
    %4 = vector.extract_strided_slice %3 {offsets = [7, 0], sizes = [16, 8], strides = [1, 1]} : vector<24x8xf32> to vector<16x8xf32>
    %5 = vector.extract_strided_slice %3 {offsets = [8, 0], sizes = [16, 8], strides = [1, 1]} : vector<24x8xf32> to vector<16x8xf32>
    %6 = tpu.concatenate %4, %5 in 1 : vector<16x8xf32>, vector<16x8xf32> -> vector<16x16xf32>
    %7 = arith.truncf %6 : vector<16x16xf32> to vector<16x16xbf16>
    %c0_2 = arith.constant 0 : index
    %c0_3 = arith.constant 0 : index
    %8 = vector.load %arg2[%c0_2, %c0_3] : memref<16x16xbf16, #tpu.memory_space<vmem>>, vector<16x16xbf16>
    %cst_4 = arith.constant dense<0.000000e+00> : vector<16x16xf32>
    %9 = tpu.matmul %7, %8, %cst_4 {dimension_numbers = #tpu.dot_dimension_numbers<[1], [0], [0], [1], [0, 0, 1, 1], [], []>} : vector<16x16xbf16>, vector<16x16xbf16>, vector<16x16xf32> -> vector<16x16xf32>
    %c0_5 = arith.constant 0 : index
    %c0_6 = arith.constant 0 : index
    %10 = vector.load %arg3[%c0_5, %c0_6] : memref<1x16xf32, #tpu.memory_space<vmem>>, vector<1x16xf32>
    %11 = vector.broadcast %10 : vector<1x16xf32> to vector<16x16xf32>
    %12 = arith.addf %9, %11 : vector<16x16xf32>
    %cst_7 = arith.constant 0.000000e+00 : f32
    %13 = vector.broadcast %cst_7 : f32 to vector<16x16xf32>
    %14 = arith.maximumf %12, %13 : vector<16x16xf32>
    %cst_8 = arith.constant 0.000000e+00 : f32
    %15 = vector.broadcast %cst_8 : f32 to vector<8x16xf32>
    %16 = tpu.concatenate %15, %14 in 0 : vector<8x16xf32>, vector<16x16xf32> -> vector<24x16xf32>
    %17 = vector.extract_strided_slice %16 {offsets = [7, 0], sizes = [16, 16], strides = [1, 1]} : vector<24x16xf32> to vector<16x16xf32>
    %18 = vector.extract_strided_slice %16 {offsets = [8, 0], sizes = [16, 16], strides = [1, 1]} : vector<24x16xf32> to vector<16x16xf32>
    %19 = tpu.concatenate %17, %18 in 1 : vector<16x16xf32>, vector<16x16xf32> -> vector<16x32xf32>
    %20 = arith.truncf %19 : vector<16x32xf32> to vector<16x32xbf16>
    %c0_9 = arith.constant 0 : index
    %c0_10 = arith.constant 0 : index
    %21 = vector.load %arg4[%c0_9, %c0_10] : memref<32x16xbf16, #tpu.memory_space<vmem>>, vector<32x16xbf16>
    %cst_11 = arith.constant dense<0.000000e+00> : vector<16x16xf32>
    %22 = tpu.matmul %20, %21, %cst_11 {dimension_numbers = #tpu.dot_dimension_numbers<[1], [0], [0], [1], [0, 0, 1, 1], [], []>} : vector<16x32xbf16>, vector<32x16xbf16>, vector<16x16xf32> -> vector<16x16xf32>
    %c0_12 = arith.constant 0 : index
    %c0_13 = arith.constant 0 : index
    %23 = vector.load %arg5[%c0_12, %c0_13] : memref<1x16xf32, #tpu.memory_space<vmem>>, vector<1x16xf32>
    %24 = vector.broadcast %23 : vector<1x16xf32> to vector<16x16xf32>
    %25 = arith.addf %22, %24 : vector<16x16xf32>
    %cst_14 = arith.constant 0.000000e+00 : f32
    %26 = vector.broadcast %cst_14 : f32 to vector<16x16xf32>
    %27 = arith.maximumf %25, %26 : vector<16x16xf32>
    %28 = arith.truncf %1 : vector<16x8xf32> to vector<16x8xbf16>
    %c0_15 = arith.constant 0 : index
    %c0_16 = arith.constant 0 : index
    %29 = vector.load %arg6[%c0_15, %c0_16] : memref<8x16xbf16, #tpu.memory_space<vmem>>, vector<8x16xbf16>
    %cst_17 = arith.constant dense<0.000000e+00> : vector<16x16xf32>
    %30 = tpu.matmul %28, %29, %cst_17 {dimension_numbers = #tpu.dot_dimension_numbers<[1], [0], [0], [1], [0, 0, 1, 1], [], []>} : vector<16x8xbf16>, vector<8x16xbf16>, vector<16x16xf32> -> vector<16x16xf32>
    %c0_18 = arith.constant 0 : index
    %c0_19 = arith.constant 0 : index
    %31 = vector.load %arg7[%c0_18, %c0_19] : memref<1x16xf32, #tpu.memory_space<vmem>>, vector<1x16xf32>
    %32 = vector.broadcast %31 : vector<1x16xf32> to vector<16x16xf32>
    %33 = arith.addf %30, %32 : vector<16x16xf32>
    %34 = arith.addf %27, %33 : vector<16x16xf32>
    %cst_20 = arith.constant 0.000000e+00 : f32
    %35 = vector.broadcast %cst_20 : f32 to vector<16x16xf32>
    %36 = arith.maximumf %34, %35 : vector<16x16xf32>
    %cst_21 = arith.constant 0.000000e+00 : f32
    %37 = vector.broadcast %cst_21 : f32 to vector<8x16xf32>
    %38 = tpu.concatenate %37, %36 in 0 : vector<8x16xf32>, vector<16x16xf32> -> vector<24x16xf32>
    %39 = vector.extract_strided_slice %38 {offsets = [6, 0], sizes = [16, 16], strides = [1, 1]} : vector<24x16xf32> to vector<16x16xf32>
    %40 = vector.extract_strided_slice %38 {offsets = [8, 0], sizes = [16, 16], strides = [1, 1]} : vector<24x16xf32> to vector<16x16xf32>
    %41 = tpu.concatenate %39, %40 in 1 : vector<16x16xf32>, vector<16x16xf32> -> vector<16x32xf32>
    %42 = arith.truncf %41 : vector<16x32xf32> to vector<16x32xbf16>
    %c0_22 = arith.constant 0 : index
    %c0_23 = arith.constant 0 : index
    %43 = vector.load %arg8[%c0_22, %c0_23] : memref<32x16xbf16, #tpu.memory_space<vmem>>, vector<32x16xbf16>
    %cst_24 = arith.constant dense<0.000000e+00> : vector<16x16xf32>
    %44 = tpu.matmul %42, %43, %cst_24 {dimension_numbers = #tpu.dot_dimension_numbers<[1], [0], [0], [1], [0, 0, 1, 1], [], []>} : vector<16x32xbf16>, vector<32x16xbf16>, vector<16x16xf32> -> vector<16x16xf32>
    %c0_25 = arith.constant 0 : index
    %c0_26 = arith.constant 0 : index
    %45 = vector.load %arg9[%c0_25, %c0_26] : memref<1x16xf32, #tpu.memory_space<vmem>>, vector<1x16xf32>
    %46 = vector.broadcast %45 : vector<1x16xf32> to vector<16x16xf32>
    %47 = arith.addf %44, %46 : vector<16x16xf32>
    %cst_27 = arith.constant 0.000000e+00 : f32
    %48 = vector.broadcast %cst_27 : f32 to vector<16x16xf32>
    %49 = arith.maximumf %47, %48 : vector<16x16xf32>
    %cst_28 = arith.constant 0.000000e+00 : f32
    %50 = vector.broadcast %cst_28 : f32 to vector<8x16xf32>
    %51 = tpu.concatenate %50, %49 in 0 : vector<8x16xf32>, vector<16x16xf32> -> vector<24x16xf32>
    %52 = vector.extract_strided_slice %51 {offsets = [6, 0], sizes = [16, 16], strides = [1, 1]} : vector<24x16xf32> to vector<16x16xf32>
    %53 = vector.extract_strided_slice %51 {offsets = [8, 0], sizes = [16, 16], strides = [1, 1]} : vector<24x16xf32> to vector<16x16xf32>
    %54 = tpu.concatenate %52, %53 in 1 : vector<16x16xf32>, vector<16x16xf32> -> vector<16x32xf32>
    %55 = arith.truncf %54 : vector<16x32xf32> to vector<16x32xbf16>
    %c0_29 = arith.constant 0 : index
    %c0_30 = arith.constant 0 : index
    %56 = vector.load %arg10[%c0_29, %c0_30] : memref<32x16xbf16, #tpu.memory_space<vmem>>, vector<32x16xbf16>
    %cst_31 = arith.constant dense<0.000000e+00> : vector<16x16xf32>
    %57 = tpu.matmul %55, %56, %cst_31 {dimension_numbers = #tpu.dot_dimension_numbers<[1], [0], [0], [1], [0, 0, 1, 1], [], []>} : vector<16x32xbf16>, vector<32x16xbf16>, vector<16x16xf32> -> vector<16x16xf32>
    %c0_32 = arith.constant 0 : index
    %c0_33 = arith.constant 0 : index
    %58 = vector.load %arg11[%c0_32, %c0_33] : memref<1x16xf32, #tpu.memory_space<vmem>>, vector<1x16xf32>
    %59 = vector.broadcast %58 : vector<1x16xf32> to vector<16x16xf32>
    %60 = arith.addf %57, %59 : vector<16x16xf32>
    %cst_34 = arith.constant 0.000000e+00 : f32
    %61 = vector.broadcast %cst_34 : f32 to vector<16x16xf32>
    %62 = arith.maximumf %60, %61 : vector<16x16xf32>
    %63 = arith.addf %62, %36 : vector<16x16xf32>
    %cst_35 = arith.constant 0.000000e+00 : f32
    %64 = vector.broadcast %cst_35 : f32 to vector<16x16xf32>
    %65 = arith.maximumf %63, %64 : vector<16x16xf32>
    %66 = arith.truncf %65 : vector<16x16xf32> to vector<16x16xbf16>
    %c0_36 = arith.constant 0 : index
    %c0_37 = arith.constant 0 : index
    %67 = vector.load %arg12[%c0_36, %c0_37] : memref<16x4xbf16, #tpu.memory_space<vmem>>, vector<16x4xbf16>
    %cst_38 = arith.constant dense<0.000000e+00> : vector<16x4xf32>
    %68 = tpu.matmul %66, %67, %cst_38 {dimension_numbers = #tpu.dot_dimension_numbers<[1], [0], [0], [1], [0, 0, 1, 1], [], []>} : vector<16x16xbf16>, vector<16x4xbf16>, vector<16x4xf32> -> vector<16x4xf32>
    %c0_39 = arith.constant 0 : index
    %c0_40 = arith.constant 0 : index
    %69 = vector.load %arg13[%c0_39, %c0_40] : memref<1x4xf32, #tpu.memory_space<vmem>>, vector<1x4xf32>
    %70 = vector.broadcast %69 : vector<1x4xf32> to vector<16x4xf32>
    %71 = arith.addf %68, %70 : vector<16x4xf32>
    %c0_41 = arith.constant 0 : index
    %c0_42 = arith.constant 0 : index
    %c0_43 = arith.constant 0 : index
    %72 = vector.load %arg14[%c0_41, %c0_42, %c0_43] : memref<1x16x4xf32, #tpu.memory_space<vmem>>, vector<1x16x4xf32>
    %73 = vector.shape_cast %72 : vector<1x16x4xf32> to vector<16x4xf32>
    %74 = vector.shape_cast %71 : vector<16x4xf32> to vector<1x16x4xf32>
    tpu.vector_store %arg14[%c0_41, %c0_42, %c0_43], %74 {strides = array<i32>} : memref<1x16x4xf32, #tpu.memory_space<vmem>>, vector<1x16x4xf32>,
    return
  }
  func.func @transform_0(%arg0: i32) -> (i32, i32, i32) {
    %c0_i32 = arith.constant 0 : i32
    %c0_i32_0 = arith.constant 0 : i32
    %c0_i32_1 = arith.constant 0 : i32
    return %arg0, %c0_i32, %c0_i32_0 : i32, i32, i32
  }
  func.func @transform_1(%arg0: i32) -> (i32, i32) {
    %c0_i32 = arith.constant 0 : i32
    %c0_i32_0 = arith.constant 0 : i32
    %c0_i32_1 = arith.constant 0 : i32
    return %c0_i32, %c0_i32_0 : i32, i32
  }
  func.func @transform_2(%arg0: i32) -> (i32, i32) {
    %c0_i32 = arith.constant 0 : i32
    %c0_i32_0 = arith.constant 0 : i32
    %c0_i32_1 = arith.constant 0 : i32
    return %c0_i32, %c0_i32_0 : i32, i32
  }
  func.func @transform_3(%arg0: i32) -> (i32, i32) {
    %c0_i32 = arith.constant 0 : i32
    %c0_i32_0 = arith.constant 0 : i32
    %c0_i32_1 = arith.constant 0 : i32
    return %c0_i32, %c0_i32_0 : i32, i32
  }
  func.func @transform_4(%arg0: i32) -> (i32, i32) {
    %c0_i32 = arith.constant 0 : i32
    %c0_i32_0 = arith.constant 0 : i32
    %c0_i32_1 = arith.constant 0 : i32
    return %c0_i32, %c0_i32_0 : i32, i32
  }
  func.func @transform_5(%arg0: i32) -> (i32, i32) {
    %c0_i32 = arith.constant 0 : i32
    %c0_i32_0 = arith.constant 0 : i32
    %c0_i32_1 = arith.constant 0 : i32
    return %c0_i32, %c0_i32_0 : i32, i32
  }
  func.func @transform_6(%arg0: i32) -> (i32, i32) {
    %c0_i32 = arith.constant 0 : i32
    %c0_i32_0 = arith.constant 0 : i32
    %c0_i32_1 = arith.constant 0 : i32
    return %c0_i32, %c0_i32_0 : i32, i32
  }
  func.func @transform_7(%arg0: i32) -> (i32, i32) {
    %c0_i32 = arith.constant 0 : i32
    %c0_i32_0 = arith.constant 0 : i32
    %c0_i32_1 = arith.constant 0 : i32
    return %c0_i32, %c0_i32_0 : i32, i32
  }
  func.func @transform_8(%arg0: i32) -> (i32, i32) {
    %c0_i32 = arith.constant 0 : i32
    %c0_i32_0 = arith.constant 0 : i32
    %c0_i32_1 = arith.constant 0 : i32
    return %c0_i32, %c0_i32_0 : i32, i32
  }
  func.func @transform_9(%arg0: i32) -> (i32, i32) {
    %c0_i32 = arith.constant 0 : i32
    %c0_i32_0 = arith.constant 0 : i32
    %c0_i32_1 = arith.constant 0 : i32
    return %c0_i32, %c0_i32_0 : i32, i32
  }
  func.func @transform_10(%arg0: i32) -> (i32, i32) {
    %c0_i32 = arith.constant 0 : i32
    %c0_i32_0 = arith.constant 0 : i32
    %c0_i32_1 = arith.constant 0 : i32
    return %c0_i32, %c0_i32_0 : i32, i32
  }
  func.func @transform_11(%arg0: i32) -> (i32, i32) {
    %c0_i32 = arith.constant 0 : i32
    %c0_i32_0 = arith.constant 0 : i32
    %c0_i32_1 = arith.constant 0 : i32
    return %c0_i32, %c0_i32_0 : i32, i32
  }
  func.func @transform_12(%arg0: i32) -> (i32, i32) {
    %c0_i32 = arith.constant 0 : i32
    %c0_i32_0 = arith.constant 0 : i32
    %c0_i32_1 = arith.constant 0 : i32
    return %c0_i32, %c0_i32_0 : i32, i32
  }
  func.func @transform_13(%arg0: i32) -> (i32, i32, i32) {
    %c0_i32 = arith.constant 0 : i32
    %c0_i32_0 = arith.constant 0 : i32
    %c0_i32_1 = arith.constant 0 : i32
    return %arg0, %c0_i32, %c0_i32_0 : i32, i32, i32
  }
}

</mosaic_0001>

<llo_original>
// kernel: tpu_custom_call.1
$region0: #{tpu_custom_call.1}
  #allocation0 [shape = 'u32[]', space=smem, size = 0x4, offset = 0x4, fixed_abs, tag = 'smem constant byte address 0x4 - core index']
  #allocation1 [shape = 'u32[144,128]{1,0:T(1,128)}', space=vmem, size = 0x12000, scoped, tag = 'internal scratch']
  %s0 = inlined_call_operand.vmem [shape: f32[2,16,8], index: 0, kind: input, shape index: {}]
  %s1 = inlined_call_operand.vmem [shape: bf16[16,16], index: 1, kind: input, shape index: {}]
  %s2 = inlined_call_operand.vmem [shape: f32[1,16], index: 2, kind: input, shape index: {}]
  %s3 = inlined_call_operand.vmem [shape: bf16[32,16], index: 3, kind: input, shape index: {}]
  %s4 = inlined_call_operand.vmem [shape: f32[1,16], index: 4, kind: input, shape index: {}]
  %s5 = inlined_call_operand.vmem [shape: bf16[8,16], index: 5, kind: input, shape index: {}]
  %s6 = inlined_call_operand.vmem [shape: f32[1,16], index: 6, kind: input, shape index: {}]
  %s7 = inlined_call_operand.vmem [shape: bf16[32,16], index: 7, kind: input, shape index: {}]
  %s8 = inlined_call_operand.vmem [shape: f32[1,16], index: 8, kind: input, shape index: {}]
  %s9 = inlined_call_operand.vmem [shape: bf16[32,16], index: 9, kind: input, shape index: {}]
  %s10 = inlined_call_operand.vmem [shape: f32[1,16], index: 10, kind: input, shape index: {}]
  %s11 = inlined_call_operand.vmem [shape: bf16[16,4], index: 11, kind: input, shape index: {}]
  %s12 = inlined_call_operand.vmem [shape: f32[1,4], index: 12, kind: input, shape index: {}]
  %s13 = inlined_call_operand.vmem [shape: f32[2,16,4], index: 13, kind: output, shape index: {}]
  %s14 = sld [smem:[#allocation0]]
  $region85: #{tpu_custom_call.1} parent=0
    _
  %s16 = ssub.s32 1, %s14
  %s17 = scalar_select 0, %s16, %s14
  loop: start=0, step=1, limit=4
  $region2: #{tpu_custom_call.1} parent=0 // loop_pre_header
    _
  $region3: #{tpu_custom_call.1} parent=0 // loop_header
    %s19 = sphi 0, %s23
    %p20 = scmp.ge.s32.totalorder %s19, 4
    %s29 = sphi 0, %s31
    %s32 = sphi 0, %s29
    %s33 = sphi 0, %s32
    %s49 = sphi 0, %s33
    %s53 = sphi 0, %s53
    %s55 = sphi 0, %s53
    %s56 = sphi 0, %s55
    %s70 = sphi 0, %s56
    %s74 = sphi 0, %s74
    %s76 = sphi 0, %s74
    %s77 = sphi 0, %s76
    %s91 = sphi 0, %s77
    %s95 = sphi 0, %s95
    %s97 = sphi 0, %s95
    %s98 = sphi 0, %s97
    %s112 = sphi 0, %s98
    %s116 = sphi 0, %s116
    %s118 = sphi 0, %s116
    %s119 = sphi 0, %s118
    %s133 = sphi 0, %s119
    %s137 = sphi 0, %s137
    %s139 = sphi 0, %s137
    %s140 = sphi 0, %s139
    %s154 = sphi 0, %s140
    %s158 = sphi 0, %s158
    %s160 = sphi 0, %s158
    %s161 = sphi 0, %s160
    %s175 = sphi 0, %s161
    %s179 = sphi 0, %s179
    %s181 = sphi 0, %s179
    %s182 = sphi 0, %s181
    %s196 = sphi 0, %s182
    %s200 = sphi 0, %s200
    %s202 = sphi 0, %s200
    %s203 = sphi 0, %s202
    %s217 = sphi 0, %s203
    %s221 = sphi 0, %s221
    %s223 = sphi 0, %s221
    %s224 = sphi 0, %s223
    %s238 = sphi 0, %s224
    %s242 = sphi 0, %s242
    %s244 = sphi 0, %s242
    %s245 = sphi 0, %s244
    %s259 = sphi 0, %s245
    %s263 = sphi 0, %s263
    %s265 = sphi 0, %s263
    %s266 = sphi 0, %s265
    %s280 = sphi 0, %s266
    %s284 = sphi 0, %s284
    %s286 = sphi 0, %s284
    %s287 = sphi 0, %s286
    %s301 = sphi 0, %s287
    %s307 = sphi 0, %s309
    %s310 = sphi 0, %s307
    %s311 = sphi 0, %s310
    %s327 = sphi 0, %s311
  $region4: #{tpu_custom_call.1} parent=0 // loop_header_branch
    %22 = sbr.rel (%p20) target = $region8
  $region5: #{tpu_custom_call.1} parent=0 // loop_body
    %s24 = ssub.s32 %s19, 1
    %s25 = ssub.s32 %s19, 2
    %s26 = sadd.s32 %s19, 1
    %s27 = ssub.s32 %s19, %s26
    %p28 = scmp.eq.s32.totalorder %s27, 0
    %s30 = sadd.s32 %s29, 1
    %s31 = scalar_select %p28, %s29, %s30
    %p34 = pneg %p28
    %p35 = scmp.eq.s32.totalorder %s19, 1
    %p36 = por %p34, %p35
    %p37 = scmp.ne.s32.totalorder %s29, %s32
    %p38 = scmp.eq.s32.totalorder %s19, 0
    %p39 = por %p37, %p38
    %p40 = scmp.ne.s32.totalorder %s29, %s32
    %p41 = scmp.eq.s32.totalorder %s24, 1
    %p42 = por %p40, %p41
    %p43 = scmp.ne.s32.totalorder %s32, %s33
    %p44 = scmp.eq.s32.totalorder %s24, 0
    %p45 = por %p43, %p44
    %p46 = scmp.ne.s32.totalorder %s32, %s33
    %p47 = scmp.eq.s32.totalorder %s25, 1
    %p48 = por %p46, %p47
    %p50 = scmp.ne.s32.totalorder %s33, %s49
    %p51 = scmp.eq.s32.totalorder %s25, 0
    %p52 = por %p50, %p51
    %s54 = sadd.s32 %s53, 1
    %p57 = scmp.eq.s32.totalorder %s19, 1
    %p58 = scmp.ne.s32.totalorder %s53, %s55
    %p59 = scmp.eq.s32.totalorder %s19, 0
    %p60 = por %p58, %p59
    %p61 = scmp.ne.s32.totalorder %s53, %s55
    %p62 = scmp.eq.s32.totalorder %s24, 1
    %p63 = por %p61, %p62
    %p64 = scmp.ne.s32.totalorder %s55, %s56
    %p65 = scmp.eq.s32.totalorder %s24, 0
    %p66 = por %p64, %p65
    %p67 = scmp.ne.s32.totalorder %s55, %s56
    %p68 = scmp.eq.s32.totalorder %s25, 1
    %p69 = por %p67, %p68
    %p71 = scmp.ne.s32.totalorder %s56, %s70
    %p72 = scmp.eq.s32.totalorder %s25, 0
    %p73 = por %p71, %p72
    %s75 = sadd.s32 %s74, 1
    %p78 = scmp.eq.s32.totalorder %s19, 1
    %p79 = scmp.ne.s32.totalorder %s74, %s76
    %p80 = scmp.eq.s32.totalorder %s19, 0
    %p81 = por %p79, %p80
    %p82 = scmp.ne.s32.totalorder %s74, %s76
    %p83 = scmp.eq.s32.totalorder %s24, 1
    %p84 = por %p82, %p83
    %p85 = scmp.ne.s32.totalorder %s76, %s77
    %p86 = scmp.eq.s32.totalorder %s24, 0
    %p87 = por %p85, %p86
    %p88 = scmp.ne.s32.totalorder %s76, %s77
    %p89 = scmp.eq.s32.totalorder %s25, 1
    %p90 = por %p88, %p89
    %p92 = scmp.ne.s32.totalorder %s77, %s91
    %p93 = scmp.eq.s32.totalorder %s25, 0
    %p94 = por %p92, %p93
    %s96 = sadd.s32 %s95, 1
    %p99 = scmp.eq.s32.totalorder %s19, 1
    %p100 = scmp.ne.s32.totalorder %s95, %s97
    %p101 = scmp.eq.s32.totalorder %s19, 0
    %p102 = por %p100, %p101
    %p103 = scmp.ne.s32.totalorder %s95, %s97
    %p104 = scmp.eq.s32.totalorder %s24, 1
    %p105 = por %p103, %p104
    %p106 = scmp.ne.s32.totalorder %s97, %s98
    %p107 = scmp.eq.s32.totalorder %s24, 0
    %p108 = por %p106, %p107
    %p109 = scmp.ne.s32.totalorder %s97, %s98
    %p110 = scmp.eq.s32.totalorder %s25, 1
    %p111 = por %p109, %p110
    %p113 = scmp.ne.s32.totalorder %s98, %s112
    %p114 = scmp.eq.s32.totalorder %s25, 0
    %p115 = por %p113, %p114
    %s117 = sadd.s32 %s116, 1
    %p120 = scmp.eq.s32.totalorder %s19, 1
    %p121 = scmp.ne.s32.totalorder %s116, %s118
    %p122 = scmp.eq.s32.totalorder %s19, 0
    %p123 = por %p121, %p122
    %p124 = scmp.ne.s32.totalorder %s116, %s118
    %p125 = scmp.eq.s32.totalorder %s24, 1
    %p126 = por %p124, %p125
    %p127 = scmp.ne.s32.totalorder %s118, %s119
    %p128 = scmp.eq.s32.totalorder %s24, 0
    %p129 = por %p127, %p128
    %p130 = scmp.ne.s32.totalorder %s118, %s119
    %p131 = scmp.eq.s32.totalorder %s25, 1
    %p132 = por %p130, %p131
    %p134 = scmp.ne.s32.totalorder %s119, %s133
    %p135 = scmp.eq.s32.totalorder %s25, 0
    %p136 = por %p134, %p135
    %s138 = sadd.s32 %s137, 1
    %p141 = scmp.eq.s32.totalorder %s19, 1
    %p142 = scmp.ne.s32.totalorder %s137, %s139
    %p143 = scmp.eq.s32.totalorder %s19, 0
    %p144 = por %p142, %p143
    %p145 = scmp.ne.s32.totalorder %s137, %s139
    %p146 = scmp.eq.s32.totalorder %s24, 1
    %p147 = por %p145, %p146
    %p148 = scmp.ne.s32.totalorder %s139, %s140
    %p149 = scmp.eq.s32.totalorder %s24, 0
    %p150 = por %p148, %p149
    %p151 = scmp.ne.s32.totalorder %s139, %s140
    %p152 = scmp.eq.s32.totalorder %s25, 1
    %p153 = por %p151, %p152
    %p155 = scmp.ne.s32.totalorder %s140, %s154
    %p156 = scmp.eq.s32.totalorder %s25, 0
    %p157 = por %p155, %p156
    %s159 = sadd.s32 %s158, 1
    %p162 = scmp.eq.s32.totalorder %s19, 1
    %p163 = scmp.ne.s32.totalorder %s158, %s160
    %p164 = scmp.eq.s32.totalorder %s19, 0
    %p165 = por %p163, %p164
    %p166 = scmp.ne.s32.totalorder %s158, %s160
    %p167 = scmp.eq.s32.totalorder %s24, 1
    %p168 = por %p166, %p167
    %p169 = scmp.ne.s32.totalorder %s160, %s161
    %p170 = scmp.eq.s32.totalorder %s24, 0
    %p171 = por %p169, %p170
    %p172 = scmp.ne.s32.totalorder %s160, %s161
    %p173 = scmp.eq.s32.totalorder %s25, 1
    %p174 = por %p172, %p173
    %p176 = scmp.ne.s32.totalorder %s161, %s175
    %p177 = scmp.eq.s32.totalorder %s25, 0
    %p178 = por %p176, %p177
    %s180 = sadd.s32 %s179, 1
    %p183 = scmp.eq.s32.totalorder %s19, 1
    %p184 = scmp.ne.s32.totalorder %s179, %s181
    %p185 = scmp.eq.s32.totalorder %s19, 0
    %p186 = por %p184, %p185
    %p187 = scmp.ne.s32.totalorder %s179, %s181
    %p188 = scmp.eq.s32.totalorder %s24, 1
    %p189 = por %p187, %p188
    %p190 = scmp.ne.s32.totalorder %s181, %s182
    %p191 = scmp.eq.s32.totalorder %s24, 0
    %p192 = por %p190, %p191
    %p193 = scmp.ne.s32.totalorder %s181, %s182
    %p194 = scmp.eq.s32.totalorder %s25, 1
    %p195 = por %p193, %p194
    %p197 = scmp.ne.s32.totalorder %s182, %s196
    %p198 = scmp.eq.s32.totalorder %s25, 0
    %p199 = por %p197, %p198
    %s201 = sadd.s32 %s200, 1
    %p204 = scmp.eq.s32.totalorder %s19, 1
    %p205 = scmp.ne.s32.totalorder %s200, %s202
    %p206 = scmp.eq.s32.totalorder %s19, 0
    %p207 = por %p205, %p206
    %p208 = scmp.ne.s32.totalorder %s200, %s202
    %p209 = scmp.eq.s32.totalorder %s24, 1
    %p210 = por %p208, %p209
    %p211 = scmp.ne.s32.totalorder %s202, %s203
    %p212 = scmp.eq.s32.totalorder %s24, 0
    %p213 = por %p211, %p212
    %p214 = scmp.ne.s32.totalorder %s202, %s203
    %p215 = scmp.eq.s32.totalorder %s25, 1
    %p216 = por %p214, %p215
    %p218 = scmp.ne.s32.totalorder %s203, %s217
    %p219 = scmp.eq.s32.totalorder %s25, 0
    %p220 = por %p218, %p219
    %s222 = sadd.s32 %s221, 1
    %p225 = scmp.eq.s32.totalorder %s19, 1
    %p226 = scmp.ne.s32.totalorder %s221, %s223
    %p227 = scmp.eq.s32.totalorder %s19, 0
    %p228 = por %p226, %p227
    %p229 = scmp.ne.s32.totalorder %s221, %s223
    %p230 = scmp.eq.s32.totalorder %s24, 1
    %p231 = por %p229, %p230
    %p232 = scmp.ne.s32.totalorder %s223, %s224
    %p233 = scmp.eq.s32.totalorder %s24, 0
    %p234 = por %p232, %p233
    %p235 = scmp.ne.s32.totalorder %s223, %s224
    %p236 = scmp.eq.s32.totalorder %s25, 1
    %p237 = por %p235, %p236
    %p239 = scmp.ne.s32.totalorder %s224, %s238
    %p240 = scmp.eq.s32.totalorder %s25, 0
    %p241 = por %p239, %p240
    %s243 = sadd.s32 %s242, 1
    %p246 = scmp.eq.s32.totalorder %s19, 1
    %p247 = scmp.ne.s32.totalorder %s242, %s244
    %p248 = scmp.eq.s32.totalorder %s19, 0
    %p249 = por %p247, %p248
    %p250 = scmp.ne.s32.totalorder %s242, %s244
    %p251 = scmp.eq.s32.totalorder %s24, 1
    %p252 = por %p250, %p251
    %p253 = scmp.ne.s32.totalorder %s244, %s245
    %p254 = scmp.eq.s32.totalorder %s24, 0
    %p255 = por %p253, %p254
    %p256 = scmp.ne.s32.totalorder %s244, %s245
    %p257 = scmp.eq.s32.totalorder %s25, 1
    %p258 = por %p256, %p257
    %p260 = scmp.ne.s32.totalorder %s245, %s259
    %p261 = scmp.eq.s32.totalorder %s25, 0
    %p262 = por %p260, %p261
    %s264 = sadd.s32 %s263, 1
    %p267 = scmp.eq.s32.totalorder %s19, 1
    %p268 = scmp.ne.s32.totalorder %s263, %s265
    %p269 = scmp.eq.s32.totalorder %s19, 0
    %p270 = por %p268, %p269
    %p271 = scmp.ne.s32.totalorder %s263, %s265
    %p272 = scmp.eq.s32.totalorder %s24, 1
    %p273 = por %p271, %p272
    %p274 = scmp.ne.s32.totalorder %s265, %s266
    %p275 = scmp.eq.s32.totalorder %s24, 0
    %p276 = por %p274, %p275
    %p277 = scmp.ne.s32.totalorder %s265, %s266
    %p278 = scmp.eq.s32.totalorder %s25, 1
    %p279 = por %p277, %p278
    %p281 = scmp.ne.s32.totalorder %s266, %s280
    %p282 = scmp.eq.s32.totalorder %s25, 0
    %p283 = por %p281, %p282
    %s285 = sadd.s32 %s284, 1
    %p288 = scmp.eq.s32.totalorder %s19, 1
    %p289 = scmp.ne.s32.totalorder %s284, %s286
    %p290 = scmp.eq.s32.totalorder %s19, 0
    %p291 = por %p289, %p290
    %p292 = scmp.ne.s32.totalorder %s284, %s286
    %p293 = scmp.eq.s32.totalorder %s24, 1
    %p294 = por %p292, %p293
    %p295 = scmp.ne.s32.totalorder %s286, %s287
    %p296 = scmp.eq.s32.totalorder %s24, 0
    %p297 = por %p295, %p296
    %p298 = scmp.ne.s32.totalorder %s286, %s287
    %p299 = scmp.eq.s32.totalorder %s25, 1
    %p300 = por %p298, %p299
    %p302 = scmp.ne.s32.totalorder %s287, %s301
    %p303 = scmp.eq.s32.totalorder %s25, 0
    %p304 = por %p302, %p303
    %s305 = ssub.s32 %s19, %s26
    %p306 = scmp.eq.s32.totalorder %s305, 0
    %s308 = sadd.s32 %s307, 1
    %s309 = scalar_select %p306, %s307, %s308
    %p312 = pneg %p306
    %p313 = scmp.eq.s32.totalorder %s19, 1
    %p314 = por %p312, %p313
    %p315 = scmp.ne.s32.totalorder %s307, %s310
    %p316 = scmp.eq.s32.totalorder %s19, 0
    %p317 = por %p315, %p316
    %p318 = scmp.ne.s32.totalorder %s307, %s310
    %p319 = scmp.eq.s32.totalorder %s24, 1
    %p320 = por %p318, %p319
    %p321 = scmp.ne.s32.totalorder %s310, %s311
    %p322 = scmp.eq.s32.totalorder %s24, 0
    %p323 = por %p321, %p322
    %p324 = scmp.ne.s32.totalorder %s310, %s311
    %p325 = scmp.eq.s32.totalorder %s25, 1
    %p326 = por %p324, %p325
    %p328 = scmp.ne.s32.totalorder %s311, %s327
    %p329 = scmp.eq.s32.totalorder %s25, 0
    %p330 = por %p328, %p329
    %p331 = scmp.le.s32.totalorder 1, %s19
    %p332 = scmp.lt.s32.totalorder %s19, 3
    %p333 = pnand %p331, %p332
    %p334 = pneg %p333
    // Predicated region
    $region9: #{tpu_custom_call.1} parent=5 // pred_check
      _
    $region10: #{tpu_custom_call.1} parent=5 // pred_check_branch
      %336 = sbr.rel (%p333) target = $region12
    $region11: #{tpu_custom_call.1} parent=5 // pred_region
      %s337 = ssub.s32 %s19, 1
      // Predicated region
      $region13: #{tpu_custom_call.1} parent=11 // pred_check
        %p338 = pneg %p66
      $region14: #{tpu_custom_call.1} parent=11 // pred_check_branch
        %340 = sbr.rel (%p338) target = $region16
      $region15: #{tpu_custom_call.1} parent=11 // pred_region
        _
      $region16: #{tpu_custom_call.1} parent=11 // pred_fallthru
        _
      // Predicated region
      $region17: #{tpu_custom_call.1} parent=11 // pred_check
        %p341 = pneg %p87
      $region18: #{tpu_custom_call.1} parent=11 // pred_check_branch
        %343 = sbr.rel (%p341) target = $region20
      $region19: #{tpu_custom_call.1} parent=11 // pred_region
        _
      $region20: #{tpu_custom_call.1} parent=11 // pred_fallthru
        _
      // Predicated region
      $region21: #{tpu_custom_call.1} parent=11 // pred_check
        %p344 = pneg %p108
      $region22: #{tpu_custom_call.1} parent=11 // pred_check_branch
        %346 = sbr.rel (%p344) target = $region24
      $region23: #{tpu_custom_call.1} parent=11 // pred_region
        _
      $region24: #{tpu_custom_call.1} parent=11 // pred_fallthru
        _
      // Predicated region
      $region25: #{tpu_custom_call.1} parent=11 // pred_check
        %p347 = pneg %p129
      $region26: #{tpu_custom_call.1} parent=11 // pred_check_branch
        %349 = sbr.rel (%p347) target = $region28
      $region27: #{tpu_custom_call.1} parent=11 // pred_region
        _
      $region28: #{tpu_custom_call.1} parent=11 // pred_fallthru
        _
      // Predicated region
      $region29: #{tpu_custom_call.1} parent=11 // pred_check
        %p350 = pneg %p150
      $region30: #{tpu_custom_call.1} parent=11 // pred_check_branch
        %352 = sbr.rel (%p350) target = $region32
      $region31: #{tpu_custom_call.1} parent=11 // pred_region
        _
      $region32: #{tpu_custom_call.1} parent=11 // pred_fallthru
        _
      // Predicated region
      $region33: #{tpu_custom_call.1} parent=11 // pred_check
        %p353 = pneg %p171
      $region34: #{tpu_custom_call.1} parent=11 // pred_check_branch
        %355 = sbr.rel (%p353) target = $region36
      $region35: #{tpu_custom_call.1} parent=11 // pred_region
        _
      $region36: #{tpu_custom_call.1} parent=11 // pred_fallthru
        _
      // Predicated region
      $region37: #{tpu_custom_call.1} parent=11 // pred_check
        %p356 = pneg %p192
      $region38: #{tpu_custom_call.1} parent=11 // pred_check_branch
        %358 = sbr.rel (%p356) target = $region40
      $region39: #{tpu_custom_call.1} parent=11 // pred_region
        _
      $region40: #{tpu_custom_call.1} parent=11 // pred_fallthru
        _
      // Predicated region
      $region41: #{tpu_custom_call.1} parent=11 // pred_check
        %p359 = pneg %p213
      $region42: #{tpu_custom_call.1} parent=11 // pred_check_branch
        %361 = sbr.rel (%p359) target = $region44
      $region43: #{tpu_custom_call.1} parent=11 // pred_region
        _
      $region44: #{tpu_custom_call.1} parent=11 // pred_fallthru
        _
      // Predicated region
      $region45: #{tpu_custom_call.1} parent=11 // pred_check
        %p362 = pneg %p234
      $region46: #{tpu_custom_call.1} parent=11 // pred_check_branch
        %364 = sbr.rel (%p362) target = $region48
      $region47: #{tpu_custom_call.1} parent=11 // pred_region
        _
      $region48: #{tpu_custom_call.1} parent=11 // pred_fallthru
        _
      // Predicated region
      $region49: #{tpu_custom_call.1} parent=11 // pred_check
        %p365 = pneg %p255
      $region50: #{tpu_custom_call.1} parent=11 // pred_check_branch
        %367 = sbr.rel (%p365) target = $region52
      $region51: #{tpu_custom_call.1} parent=11 // pred_region
        _
      $region52: #{tpu_custom_call.1} parent=11 // pred_fallthru
        _
      // Predicated region
      $region53: #{tpu_custom_call.1} parent=11 // pred_check
        %p368 = pneg %p276
      $region54: #{tpu_custom_call.1} parent=11 // pred_check_branch
        %370 = sbr.rel (%p368) target = $region56
      $region55: #{tpu_custom_call.1} parent=11 // pred_region
        _
      $region56: #{tpu_custom_call.1} parent=11 // pred_fallthru
        _
      // Predicated region
      $region57: #{tpu_custom_call.1} parent=11 // pred_check
        %p371 = pneg %p297
      $region58: #{tpu_custom_call.1} parent=11 // pred_check_branch
        %373 = sbr.rel (%p371) target = $region60
      $region59: #{tpu_custom_call.1} parent=11 // pred_region
        _
      $region60: #{tpu_custom_call.1} parent=11 // pred_fallthru
        _
    $region12: #{tpu_custom_call.1} parent=5 // pred_fallthru
      _
    %p374 = scmp.lt.s32.totalorder %s19, 2
    // Predicated region
    $region61: #{tpu_custom_call.1} parent=5 // pred_check
      %p375 = pneg %p374
    $region62: #{tpu_custom_call.1} parent=5 // pred_check_branch
      %377 = sbr.rel (%p375) target = $region64
    $region63: #{tpu_custom_call.1} parent=5 // pred_region
      // Predicated region
      $region65: #{tpu_custom_call.1} parent=63 // pred_check
        %p378 = pneg %p39
      $region66: #{tpu_custom_call.1} parent=63 // pred_check_branch
        %380 = sbr.rel (%p378) target = $region68
      $region67: #{tpu_custom_call.1} parent=63 // pred_region
        %p381 = scmp.lt.s32.totalorder %s19, 1
        %s382 = scalar_select %p381, %s19, 1
        %s383 = smul.addr %s382, 2
        %s384 = smul.addr %s383, 8
        %s385 = scalar_lea.vmem %s0, %s384
      $region68: #{tpu_custom_call.1} parent=63 // pred_fallthru
        _
    $region64: #{tpu_custom_call.1} parent=5 // pred_fallthru
      _
    %p386 = scmp.le.s32.totalorder 1, %s19
    %p387 = scmp.lt.s32.totalorder %s19, 3
    %p388 = pnand %p386, %p387
    %p389 = pneg %p388
    // Predicated region
    $region69: #{tpu_custom_call.1} parent=5 // pred_check
      _
    $region70: #{tpu_custom_call.1} parent=5 // pred_check_branch
      %391 = sbr.rel (%p388) target = $region72
    $region71: #{tpu_custom_call.1} parent=5 // pred_region
      %s392 = ssub.s32 %s19, 1
      %p393 = scmp.lt.s32.totalorder %s24, 1
      %s394 = scalar_select %p393, %s24, 1
      %s395 = smul.addr %s394, 2
      %s396 = smul.addr %s395, 8
      %s397 = scalar_lea.vmem %s0, %s396
      %p398 = pneg %p45
      %p399 = pneg %p42
      %p400 = pneg %p66
      %p401 = pneg %p63
      %p402 = pneg %p87
      %p403 = pneg %p84
      %p404 = pneg %p108
      %p405 = pneg %p105
      %p406 = pneg %p129
      %p407 = pneg %p126
      %p408 = pneg %p150
      %p409 = pneg %p147
      %p410 = pneg %p171
      %p411 = pneg %p168
      %p412 = pneg %p192
      %p413 = pneg %p189
      %p414 = pneg %p213
      %p415 = pneg %p210
      %p416 = pneg %p234
      %p417 = pneg %p231
      %p418 = pneg %p255
      %p419 = pneg %p252
      %p420 = pneg %p276
      %p421 = pneg %p273
      %p422 = pneg %p297
      %p423 = pneg %p294
      %p424 = pneg %p323
      %p425 = pneg %p320
      %p426 = scmp.lt.s32.totalorder %s24, 1
      %s427 = scalar_select %p426, %s24, 1
      %s428 = smul.addr %s427, 2
      %s429 = smul.addr %s428, 8
      %s430 = scalar_lea.vmem %s13, %s429
      %p431 = scmp.lt.s32.totalorder %s24, 1
      %s432 = scalar_select %p431, %s24, 1
      %s433 = smul.addr %s432, 2
      %s434 = smul.addr %s433, 8
      %s435 = scalar_lea.vmem %s0, %s434
      %p436 = scmp.lt.s32.totalorder %s24, 1
      %s437 = scalar_select %p436, %s24, 1
      %s438 = smul.addr %s437, 2
      %s439 = smul.addr %s438, 8
      %s440 = scalar_lea.vmem %s13, %s439
      %v442 = vld [vmem:[%s435] sm:$0xff]
      %v443 = vld [vmem:[%s435 + $0x8] sm:$0xff]
      %vm446 = vcmask 1046528
      %v447 = vrot.slane %v442, 1
      %v448 = vrot.slane %v443, 1
      %v449 = vsel %vm446, %v447, %v448
      %450 = vrot.lane.b32.xlu0 %v447, 8
      %v451 = vpop.permute.xlu0 %450
      %452 = vrot.lane.b32.xlu0 %v449, 8
      %v453 = vpop.permute.xlu0 %452
      %454 = vrot.lane.b32.xlu0 %v448, 8
      %v455 = vpop.permute.xlu0 %454
      %vm459 = vcmask 64512
      %v460 = vsel %vm459, 0.0, %v451
      %v461 = vsel %vm459, %v442, %v453
      %v462 = vsel %vm459, %v443, %v455
      %v463 = vpack.c.bf16 %v461, %v460
      %v464 = vpack.c.bf16 %v462, %v462
      %v465 = vld [vmem:[%s1] sm:$0xf]
      %v466 = vld [vmem:[%s1 + $0x4] sm:$0xf]
      %v467 = vld [vmem:[%s2] sm:$0x1]
      %v469 = vlaneseq
      %v470 = vshrl.u32 %v469, 7
      %v471 = vsub.s32 0, %v470
      %v472 = vrot.slane %v467, %v471
      %vm474 = vsmask.f32 4352
      %v476 = vshrl.u32 %v463, 16
      %v478 = vrot.slane %v476, 3
      %v479 = vshll.u32 %v463, 16
      %v481 = vrot.slane %v479, 4
      %v482 = vor.u32 %v478, %v481
      %v484 = vshrl.u32 %v464, 16
      %v486 = vrot.slane %v484, 3
      %v487 = vshll.u32 %v464, 16
      %v489 = vrot.slane %v487, 4
      %v490 = vor.u32 %v486, %v489
      %v491 = vsel %vm474, %v482, %v490
      %v494 = vunpack.c.l.b16 %v465
      %v495 = vunpack.c.l.b16 %v466
      %v496 = vpack.c.b16 %v495, %v494
      %vm498 = vcmask 130048
      %v500 = vsel %vm498, %v491, 0
      %502 = vmatprep.subr.bf16.mxu0 0
      %503 = vmatpush1.bf16.msra.mxu0 %v496
      %504 = vmatprep.subr.bf16.mxu0 0
      %505 = vmatpush1.bf16.msra.mxu0 0
      %506 = vmatprep.subr.bf16.mxu0 0
      %507 = vmatpush1.bf16.msra.mxu0 0
      %508 = vmatprep.subr.bf16.mxu0 0
      %509 = vmatpush1.bf16.msra.mxu0 0
      %510 = vmatprep.subr.bf16.mxu0 0
      %511 = vmatpush1.bf16.msra.mxu0 0
      %512 = vmatprep.subr.bf16.mxu0 0
      %513 = vmatpush1.bf16.msra.mxu0 0
      %514 = vmatprep.subr.bf16.mxu0 0
      %515 = vmatpush1.bf16.msra.mxu0 0
      %516 = vmatprep.subr.bf16.mxu0 0
      %517 = vmatpush1.bf16.msra.mxu0 0
      %518 = vmatprep.subr.bf16.mxu0 0
      %519 = vmatpush1.bf16.msra.mxu0 0
      %520 = vmatprep.subr.bf16.mxu0 0
      %521 = vmatpush1.bf16.msra.mxu0 0
      %522 = vmatprep.subr.bf16.mxu0 0
      %523 = vmatpush1.bf16.msra.mxu0 0
      %524 = vmatprep.subr.bf16.mxu0 0
      %525 = vmatpush1.bf16.msra.mxu0 0
      %526 = vmatprep.subr.bf16.mxu0 0
      %527 = vmatpush1.bf16.msra.mxu0 0
      %528 = vmatprep.subr.bf16.mxu0 0
      %529 = vmatpush1.bf16.msra.mxu0 0
      %530 = vmatprep.subr.bf16.mxu0 0
      %531 = vmatpush1.bf16.msra.mxu0 0
      %532 = vmatprep.subr.bf16.mxu0 0
      %533 = vmatpush1.bf16.msra.mxu0 0
      %534 = vmatprep.mubr.bf16.mxu0 0
      %535 = vmatmul.mubr.bf16.gmra.mrb[0].mxu0 %v500
      %v536 = vpop.f32.mrb[0].mxu0
      %v537 = vadd.f32 %v472, %v536
      %v538 = vpop.f32.mrb[0].mxu0
      %v539 = vpop.f32.mrb[0].mxu0
      %v540 = vadd.f32 %v472, %v539
      %v541 = vpop.f32.mrb[0].mxu0
      %542 = vdwg.mxu0
      %v543 = vmax.f32 %v537, 0.0
      %v544 = vmax.f32 %v540, 0.0
      %v547 = vrot.slane %v543, 1
      %v548 = vrot.slane %v544, 1
      %v549 = vsel %vm446, %v547, %v548
      %550 = vrot.lane.b32.xlu0 %v547, 16
      %v551 = vpop.permute.xlu0 %550
      %552 = vrot.lane.b32.xlu0 %v549, 16
      %v553 = vpop.permute.xlu0 %552
      %554 = vrot.lane.b32.xlu0 %v548, 16
      %v555 = vpop.permute.xlu0 %554
      %v559 = vsel %vm498, 0.0, %v551
      %v560 = vsel %vm498, %v543, %v553
      %v561 = vsel %vm498, %v544, %v555
      %v562 = vpack.c.bf16 %v560, %v559
      %v563 = vpack.c.bf16 %v561, %v561
      %v564 = vld [vmem:[%s3] sm:$0xf]
      %v565 = vld [vmem:[%s3 + $0x4] sm:$0xf]
      %v566 = vld [vmem:[%s3 + $0x8] sm:$0xf]
      %v567 = vld [vmem:[%s3 + $0xc] sm:$0xf]
      %v568 = vld [vmem:[%s4] sm:$0x1]
      %v570 = vlaneseq
      %v571 = vshrl.u32 %v570, 7
      %v572 = vsub.s32 0, %v571
      %v573 = vrot.slane %v568, %v572
      %v576 = vshrl.u32 %v562, 16
      %v578 = vrot.slane %v576, 3
      %v579 = vshll.u32 %v562, 16
      %v581 = vrot.slane %v579, 4
      %v582 = vor.u32 %v578, %v581
      %v584 = vshrl.u32 %v563, 16
      %v586 = vrot.slane %v584, 3
      %v587 = vshll.u32 %v563, 16
      %v589 = vrot.slane %v587, 4
      %v590 = vor.u32 %v586, %v589
      %v591 = vsel %vm474, %v582, %v590
      %v596 = vunpack.c.l.b16 %v564
      %v597 = vunpack.c.l.b16 %v565
      %v598 = vunpack.c.l.b16 %v566
      %v599 = vunpack.c.l.b16 %v567
      %v600 = vpack.c.b16 %v597, %v596
      %v601 = vpack.c.b16 %v599, %v598
      %vm604 = vcmask 261120
      %v606 = vsel %vm604, %v591, 0
      %608 = vmatprep.subr.bf16.mxu0 0
      %609 = vmatpush1.bf16.msra.mxu0 %v600
      %610 = vmatprep.subr.bf16.mxu0 0
      %611 = vmatpush1.bf16.msra.mxu0 %v601
      %612 = vmatprep.subr.bf16.mxu0 0
      %613 = vmatpush1.bf16.msra.mxu0 0
      %614 = vmatprep.subr.bf16.mxu0 0
      %615 = vmatpush1.bf16.msra.mxu0 0
      %616 = vmatprep.subr.bf16.mxu0 0
      %617 = vmatpush1.bf16.msra.mxu0 0
      %618 = vmatprep.subr.bf16.mxu0 0
      %619 = vmatpush1.bf16.msra.mxu0 0
      %620 = vmatprep.subr.bf16.mxu0 0
      %621 = vmatpush1.bf16.msra.mxu0 0
      %622 = vmatprep.subr.bf16.mxu0 0
      %623 = vmatpush1.bf16.msra.mxu0 0
      %624 = vmatprep.subr.bf16.mxu0 0
      %625 = vmatpush1.bf16.msra.mxu0 0
      %626 = vmatprep.subr.bf16.mxu0 0
      %627 = vmatpush1.bf16.msra.mxu0 0
      %628 = vmatprep.subr.bf16.mxu0 0
      %629 = vmatpush1.bf16.msra.mxu0 0
      %630 = vmatprep.subr.bf16.mxu0 0
      %631 = vmatpush1.bf16.msra.mxu0 0
      %632 = vmatprep.subr.bf16.mxu0 0
      %633 = vmatpush1.bf16.msra.mxu0 0
      %634 = vmatprep.subr.bf16.mxu0 0
      %635 = vmatpush1.bf16.msra.mxu0 0
      %636 = vmatprep.subr.bf16.mxu0 0
      %637 = vmatpush1.bf16.msra.mxu0 0
      %638 = vmatprep.subr.bf16.mxu0 0
      %639 = vmatpush1.bf16.msra.mxu0 0
      %640 = vmatprep.mubr.bf16.mxu0 0
      %641 = vmatmul.mubr.bf16.gmra.mrb[0].mxu0 %v606
      %v642 = vpop.f32.mrb[0].mxu0
      %v643 = vadd.f32 %v573, %v642
      %v644 = vpop.f32.mrb[0].mxu0
      %v645 = vpop.f32.mrb[0].mxu0
      %v646 = vadd.f32 %v573, %v645
      %v647 = vpop.f32.mrb[0].mxu0
      %648 = vdwg.mxu0
      %v649 = vmax.f32 %v643, 0.0
      %v650 = vmax.f32 %v646, 0.0
      %v651 = vpack.c.bf16 %v443, %v442
      %v652 = vld [vmem:[%s5] sm:$0xf]
      %v653 = vld [vmem:[%s6] sm:$0x1]
      %v655 = vlaneseq
      %v656 = vshrl.u32 %v655, 7
      %v657 = vsub.s32 0, %v656
      %v658 = vrot.slane %v653, %v657
      %v661 = vsel %vm459, %v651, 0
      %vm663 = vcmask 1043456
      %v665 = vsel %vm663, %v652, 0
      %667 = vmatprep.subr.bf16.mxu0 0
      %668 = vmatpush1.bf16.msra.mxu0 %v665
      %669 = vmatprep.subr.bf16.mxu0 0
      %670 = vmatpush1.bf16.msra.mxu0 0
      %671 = vmatprep.subr.bf16.mxu0 0
      %672 = vmatpush1.bf16.msra.mxu0 0
      %673 = vmatprep.subr.bf16.mxu0 0
      %674 = vmatpush1.bf16.msra.mxu0 0
      %675 = vmatprep.subr.bf16.mxu0 0
      %676 = vmatpush1.bf16.msra.mxu0 0
      %677 = vmatprep.subr.bf16.mxu0 0
      %678 = vmatpush1.bf16.msra.mxu0 0
      %679 = vmatprep.subr.bf16.mxu0 0
      %680 = vmatpush1.bf16.msra.mxu0 0
      %681 = vmatprep.subr.bf16.mxu0 0
      %682 = vmatpush1.bf16.msra.mxu0 0
      %683 = vmatprep.subr.bf16.mxu0 0
      %684 = vmatpush1.bf16.msra.mxu0 0
      %685 = vmatprep.subr.bf16.mxu0 0
      %686 = vmatpush1.bf16.msra.mxu0 0
      %687 = vmatprep.subr.bf16.mxu0 0
      %688 = vmatpush1.bf16.msra.mxu0 0
      %689 = vmatprep.subr.bf16.mxu0 0
      %690 = vmatpush1.bf16.msra.mxu0 0
      %691 = vmatprep.subr.bf16.mxu0 0
      %692 = vmatpush1.bf16.msra.mxu0 0
      %693 = vmatprep.subr.bf16.mxu0 0
      %694 = vmatpush1.bf16.msra.mxu0 0
      %695 = vmatprep.subr.bf16.mxu0 0
      %696 = vmatpush1.bf16.msra.mxu0 0
      %697 = vmatprep.subr.bf16.mxu0 0
      %698 = vmatpush1.bf16.msra.mxu0 0
      %699 = vmatprep.mubr.bf16.mxu0 0
      %700 = vmatmul.mubr.bf16.gmra.mrb[0].mxu0 %v661
      %v701 = vpop.f32.mrb[0].mxu0
      %v702 = vadd.f32 %v658, %v701
      %v703 = vpop.f32.mrb[0].mxu0
      %v704 = vpop.f32.mrb[0].mxu0
      %v705 = vadd.f32 %v658, %v704
      %v706 = vpop.f32.mrb[0].mxu0
      %707 = vdwg.mxu0
      %v708 = vadd.f32 %v649, %v702
      %v709 = vadd.f32 %v650, %v705
      %v710 = vmax.f32 %v708, 0.0
      %v711 = vmax.f32 %v709, 0.0
      %vm714 = vcmask 1045504
      %v715 = vrot.slane %v710, 2
      %v716 = vrot.slane %v711, 2
      %v717 = vsel %vm714, %v715, %v716
      %718 = vrot.lane.b32.xlu0 %v715, 16
      %v719 = vpop.permute.xlu0 %718
      %720 = vrot.lane.b32.xlu0 %v717, 16
      %v721 = vpop.permute.xlu0 %720
      %722 = vrot.lane.b32.xlu0 %v716, 16
      %v723 = vpop.permute.xlu0 %722
      %v727 = vsel %vm498, 0.0, %v719
      %v728 = vsel %vm498, %v710, %v721
      %v729 = vsel %vm498, %v711, %v723
      %v730 = vpack.c.bf16 %v728, %v727
      %v731 = vpack.c.bf16 %v729, %v729
      %v732 = vld [vmem:[%s7] sm:$0xf]
      %v733 = vld [vmem:[%s7 + $0x4] sm:$0xf]
      %v734 = vld [vmem:[%s7 + $0x8] sm:$0xf]
      %v735 = vld [vmem:[%s7 + $0xc] sm:$0xf]
      %v736 = vld [vmem:[%s8] sm:$0x1]
      %v738 = vlaneseq
      %v739 = vshrl.u32 %v738, 7
      %v740 = vsub.s32 0, %v739
      %v741 = vrot.slane %v736, %v740
      %vm745 = vcmask 1044480
      %v746 = vrot.slane %v730, 3
      %v747 = vrot.slane %v731, 3
      %v748 = vsel %vm745, %v746, %v747
      %v753 = vunpack.c.l.b16 %v732
      %v754 = vunpack.c.l.b16 %v733
      %v755 = vunpack.c.l.b16 %v734
      %v756 = vunpack.c.l.b16 %v735
      %v757 = vpack.c.b16 %v754, %v753
      %v758 = vpack.c.b16 %v756, %v755
      %v762 = vsel %vm604, %v748, 0
      %764 = vmatprep.subr.bf16.mxu0 0
      %765 = vmatpush1.bf16.msra.mxu0 %v757
      %766 = vmatprep.subr.bf16.mxu0 0
      %767 = vmatpush1.bf16.msra.mxu0 %v758
      %768 = vmatprep.subr.bf16.mxu0 0
      %769 = vmatpush1.bf16.msra.mxu0 0
      %770 = vmatprep.subr.bf16.mxu0 0
      %771 = vmatpush1.bf16.msra.mxu0 0
      %772 = vmatprep.subr.bf16.mxu0 0
      %773 = vmatpush1.bf16.msra.mxu0 0
      %774 = vmatprep.subr.bf16.mxu0 0
      %775 = vmatpush1.bf16.msra.mxu0 0
      %776 = vmatprep.subr.bf16.mxu0 0
      %777 = vmatpush1.bf16.msra.mxu0 0
      %778 = vmatprep.subr.bf16.mxu0 0
      %779 = vmatpush1.bf16.msra.mxu0 0
      %780 = vmatprep.subr.bf16.mxu0 0
      %781 = vmatpush1.bf16.msra.mxu0 0
      %782 = vmatprep.subr.bf16.mxu0 0
      %783 = vmatpush1.bf16.msra.mxu0 0
      %784 = vmatprep.subr.bf16.mxu0 0
      %785 = vmatpush1.bf16.msra.mxu0 0
      %786 = vmatprep.subr.bf16.mxu0 0
      %787 = vmatpush1.bf16.msra.mxu0 0
      %788 = vmatprep.subr.bf16.mxu0 0
      %789 = vmatpush1.bf16.msra.mxu0 0
      %790 = vmatprep.subr.bf16.mxu0 0
      %791 = vmatpush1.bf16.msra.mxu0 0
      %792 = vmatprep.subr.bf16.mxu0 0
      %793 = vmatpush1.bf16.msra.mxu0 0
      %794 = vmatprep.subr.bf16.mxu0 0
      %795 = vmatpush1.bf16.msra.mxu0 0
      %796 = vmatprep.mubr.bf16.mxu0 0
      %797 = vmatmul.mubr.bf16.gmra.mrb[0].mxu0 %v762
      %v798 = vpop.f32.mrb[0].mxu0
      %v799 = vadd.f32 %v741, %v798
      %v800 = vpop.f32.mrb[0].mxu0
      %v801 = vpop.f32.mrb[0].mxu0
      %v802 = vadd.f32 %v741, %v801
      %v803 = vpop.f32.mrb[0].mxu0
      %804 = vdwg.mxu0
      %v805 = vmax.f32 %v799, 0.0
      %v806 = vmax.f32 %v802, 0.0
      %v809 = vrot.slane %v805, 2
      %v810 = vrot.slane %v806, 2
      %v811 = vsel %vm714, %v809, %v810
      %812 = vrot.lane.b32.xlu0 %v809, 16
      %v813 = vpop.permute.xlu0 %812
      %814 = vrot.lane.b32.xlu0 %v811, 16
      %v815 = vpop.permute.xlu0 %814
      %816 = vrot.lane.b32.xlu0 %v810, 16
      %v817 = vpop.permute.xlu0 %816
      %v821 = vsel %vm498, 0.0, %v813
      %v822 = vsel %vm498, %v805, %v815
      %v823 = vsel %vm498, %v806, %v817
      %v824 = vpack.c.bf16 %v822, %v821
      %v825 = vpack.c.bf16 %v823, %v823
      %v826 = vld [vmem:[%s9] sm:$0xf]
      %v827 = vld [vmem:[%s9 + $0x4] sm:$0xf]
      %v828 = vld [vmem:[%s9 + $0x8] sm:$0xf]
      %v829 = vld [vmem:[%s9 + $0xc] sm:$0xf]
      %v830 = vld [vmem:[%s10] sm:$0x1]
      %v832 = vlaneseq
      %v833 = vshrl.u32 %v832, 7
      %v834 = vsub.s32 0, %v833
      %v835 = vrot.slane %v830, %v834
      %v839 = vrot.slane %v824, 3
      %v840 = vrot.slane %v825, 3
      %v841 = vsel %vm745, %v839, %v840
      %v846 = vunpack.c.l.b16 %v826
      %v847 = vunpack.c.l.b16 %v827
      %v848 = vunpack.c.l.b16 %v828
      %v849 = vunpack.c.l.b16 %v829
      %v850 = vpack.c.b16 %v847, %v846
      %v851 = vpack.c.b16 %v849, %v848
      %v855 = vsel %vm604, %v841, 0
      %857 = vmatprep.subr.bf16.mxu0 0
      %858 = vmatpush1.bf16.msra.mxu0 %v850
      %859 = vmatprep.subr.bf16.mxu0 0
      %860 = vmatpush1.bf16.msra.mxu0 %v851
      %861 = vmatprep.subr.bf16.mxu0 0
      %862 = vmatpush1.bf16.msra.mxu0 0
      %863 = vmatprep.subr.bf16.mxu0 0
      %864 = vmatpush1.bf16.msra.mxu0 0
      %865 = vmatprep.subr.bf16.mxu0 0
      %866 = vmatpush1.bf16.msra.mxu0 0
      %867 = vmatprep.subr.bf16.mxu0 0
      %868 = vmatpush1.bf16.msra.mxu0 0
      %869 = vmatprep.subr.bf16.mxu0 0
      %870 = vmatpush1.bf16.msra.mxu0 0
      %871 = vmatprep.subr.bf16.mxu0 0
      %872 = vmatpush1.bf16.msra.mxu0 0
      %873 = vmatprep.subr.bf16.mxu0 0
      %874 = vmatpush1.bf16.msra.mxu0 0
      %875 = vmatprep.subr.bf16.mxu0 0
      %876 = vmatpush1.bf16.msra.mxu0 0
      %877 = vmatprep.subr.bf16.mxu0 0
      %878 = vmatpush1.bf16.msra.mxu0 0
      %879 = vmatprep.subr.bf16.mxu0 0
      %880 = vmatpush1.bf16.msra.mxu0 0
      %881 = vmatprep.subr.bf16.mxu0 0
      %882 = vmatpush1.bf16.msra.mxu0 0
      %883 = vmatprep.subr.bf16.mxu0 0
      %884 = vmatpush1.bf16.msra.mxu0 0
      %885 = vmatprep.subr.bf16.mxu0 0
      %886 = vmatpush1.bf16.msra.mxu0 0
      %887 = vmatprep.subr.bf16.mxu0 0
      %888 = vmatpush1.bf16.msra.mxu0 0
      %889 = vmatprep.mubr.bf16.mxu0 0
      %890 = vmatmul.mubr.bf16.gmra.mrb[0].mxu0 %v855
      %v891 = vpop.f32.mrb[0].mxu0
      %v892 = vadd.f32 %v835, %v891
      %v893 = vpop.f32.mrb[0].mxu0
      %v894 = vpop.f32.mrb[0].mxu0
      %v895 = vadd.f32 %v835, %v894
      %v896 = vpop.f32.mrb[0].mxu0
      %897 = vdwg.mxu0
      %v898 = vmax.f32 %v892, 0.0
      %v899 = vmax.f32 %v895, 0.0
      %v900 = vadd.f32 %v898, %v710
      %v901 = vadd.f32 %v899, %v711
      %v902 = vmax.f32 %v900, 0.0
      %v903 = vmax.f32 %v901, 0.0
      %v904 = vpack.c.bf16 %v903, %v902
      %v905 = vld [vmem:[%s11] sm:$0xf]
      %v906 = vld [vmem:[%s11 + $0x4] sm:$0xf]
      %v907 = vld [vmem:[%s12] sm:$0x1]
      %v909 = vlaneseq
      %v910 = vshrl.u32 %v909, 7
      %v911 = vsub.s32 0, %v910
      %v912 = vrot.slane %v907, %v911
      %v916 = vunpack.c.l.b16 %v905
      %v917 = vunpack.c.l.b16 %v906
      %v918 = vpack.c.b16 %v917, %v916
      %v921 = vsel %vm498, %v904, 0
      %923 = vmatprep.subr.bf16.mxu0 0
      %924 = vmatpush1.bf16.msra.mxu0 %v918
      %925 = vmatprep.subr.bf16.mxu0 0
      %926 = vmatpush1.bf16.msra.mxu0 0
      %927 = vmatprep.subr.bf16.mxu0 0
      %928 = vmatpush1.bf16.msra.mxu0 0
      %929 = vmatprep.subr.bf16.mxu0 0
      %930 = vmatpush1.bf16.msra.mxu0 0
      %931 = vmatprep.subr.bf16.mxu0 0
      %932 = vmatpush1.bf16.msra.mxu0 0
      %933 = vmatprep.subr.bf16.mxu0 0
      %934 = vmatpush1.bf16.msra.mxu0 0
      %935 = vmatprep.subr.bf16.mxu0 0
      %936 = vmatpush1.bf16.msra.mxu0 0
      %937 = vmatprep.subr.bf16.mxu0 0
      %938 = vmatpush1.bf16.msra.mxu0 0
      %939 = vmatprep.subr.bf16.mxu0 0
      %940 = vmatpush1.bf16.msra.mxu0 0
      %941 = vmatprep.subr.bf16.mxu0 0
      %942 = vmatpush1.bf16.msra.mxu0 0
      %943 = vmatprep.subr.bf16.mxu0 0
      %944 = vmatpush1.bf16.msra.mxu0 0
      %945 = vmatprep.subr.bf16.mxu0 0
      %946 = vmatpush1.bf16.msra.mxu0 0
      %947 = vmatprep.subr.bf16.mxu0 0
      %948 = vmatpush1.bf16.msra.mxu0 0
      %949 = vmatprep.subr.bf16.mxu0 0
      %950 = vmatpush1.bf16.msra.mxu0 0
      %951 = vmatprep.subr.bf16.mxu0 0
      %952 = vmatpush1.bf16.msra.mxu0 0
      %953 = vmatprep.subr.bf16.mxu0 0
      %954 = vmatpush1.bf16.msra.mxu0 0
      %955 = vmatprep.mubr.bf16.mxu0 0
      %956 = vmatmul.mubr.bf16.gmra.mrb[0].mxu0 %v921
      %v957 = vpop.f32.mrb[0].mxu0
      %v958 = vadd.f32 %v912, %v957
      %v959 = vpop.f32.mrb[0].mxu0
      %v960 = vpop.f32.mrb[0].mxu0
      %v961 = vadd.f32 %v912, %v960
      %v962 = vpop.f32.mrb[0].mxu0
      %963 = vdwg.mxu0
      %vm964 = vcmask 31744
      %965 = vst.msk [vmem:[%s440] sm:$0xff] %vm964, %v958
      %966 = vst.msk [vmem:[%s440 + $0x8] sm:$0xff] %vm964, %v961
      %p967 = scmp.lt.s32.totalorder %s24, 1
      %s968 = scalar_select %p967, %s24, 1
      %s969 = smul.addr %s968, 2
      %s970 = smul.addr %s969, 8
      %s971 = scalar_lea.vmem %s13, %s970
      // Predicated region
      $region73: #{tpu_custom_call.1} parent=71 // pred_check
        %p972 = pneg %p320
      $region74: #{tpu_custom_call.1} parent=71 // pred_check_branch
        %974 = sbr.rel (%p972) target = $region76
      $region75: #{tpu_custom_call.1} parent=71 // pred_region
        _
      $region76: #{tpu_custom_call.1} parent=71 // pred_fallthru
        _
    $region72: #{tpu_custom_call.1} parent=5 // pred_fallthru
      _
    %p975 = scmp.le.s32.totalorder 2, %s19
    // Predicated region
    $region77: #{tpu_custom_call.1} parent=5 // pred_check
      %p976 = pneg %p975
    $region78: #{tpu_custom_call.1} parent=5 // pred_check_branch
      %978 = sbr.rel (%p976) target = $region80
    $region79: #{tpu_custom_call.1} parent=5 // pred_region
      %s979 = ssub.s32 %s19, 2
      // Predicated region
      $region81: #{tpu_custom_call.1} parent=79 // pred_check
        %p980 = pneg %p326
      $region82: #{tpu_custom_call.1} parent=79 // pred_check_branch
        %982 = sbr.rel (%p980) target = $region84
      $region83: #{tpu_custom_call.1} parent=79 // pred_region
        %p983 = scmp.lt.s32.totalorder %s25, 1
        %s984 = scalar_select %p983, %s25, 1
        %s985 = smul.addr %s984, 2
        %s986 = smul.addr %s985, 8
        %s987 = scalar_lea.vmem %s13, %s986
      $region84: #{tpu_custom_call.1} parent=79 // pred_fallthru
        _
    $region80: #{tpu_custom_call.1} parent=5 // pred_fallthru
      _
  $region6: #{tpu_custom_call.1} parent=0 // loop_footer
    %s23 = sadd.s32 1, %s19
  $region7: #{tpu_custom_call.1} parent=0 // loop_footer_branch
    %18 = sbr.rel target = $region3
  $region8: #{tpu_custom_call.1} parent=0 // loop_exit
    _

</llo_original>
